<compile_context>
chip_gen: v7x
topology: tpu7x:2x2x1
jax: 0.10.0
libtpu: 0.0.40
codegen_flags: <defaults>
</compile_context>

<pallas_src>
from functools import partial

import jax
import jax.numpy as jnp
from jax.experimental import pallas as pl
from jax.experimental.pallas import tpu as pltpu


_STATS_LANES = 128  # pad per-channel stats to one full lane tile -> unmasked stores


def _pack_banded_weight(w, H, W, dilation):
    """Fold (kh, kw) taps + H/W zero-padding of a 3x3x3 conv into banded matrices and
    stack the 3 depth taps along K.

    w: (3, 3, 3, Cin, Cout)  ->  (3*H*W*Cin, H*W*Cout), rows [kd*HWC : (kd+1)*HWC]
    hold the band for depth tap kd. Out-of-range (kh, kw) taps are simply absent
    (== zero padding). Exact encoding, no approximation.
    """
    kD, kH, kW, Cin, Cout = w.shape
    pad = dilation
    w = w.astype(jnp.float32)
    blocks = []
    for kd in range(kD):
        acc = jnp.zeros((H * W * Cin, H * W * Cout), jnp.float32)
        for kh in range(kH):
            Sh = jnp.eye(H, k=pad - kh * dilation, dtype=jnp.float32)
            for kw_ in range(kW):
                Sw = jnp.eye(W, k=pad - kw_ * dilation, dtype=jnp.float32)
                Bhw = jnp.kron(Sh, Sw)                      # (H*W, H*W) spatial band
                acc = acc + jnp.kron(Bhw, w[kd, kh, kw_])   # expand to channels
        blocks.append(acc)
    return jnp.concatenate(blocks, axis=0)                  # (3*H*W*Cin, H*W*Cout)


def _bn_relu_conv_kernel(*refs, D, dilation, add_residual, emit_stats):
    """Fused: y = conv3x3x3(relu(x * scale + bias)) [+ residual] [, channel stats].

    Refs (per grid step = NB whole samples, TM = NB*D rows):
      x_ref     : (TM, H*W*Cin)           lane-dense activations
      scale_ref : (1, H*W*Cin)            folded BN scale, pre-tiled over (h, w)
      bias_ref  : (1, H*W*Cin)            folded BN bias,  pre-tiled over (h, w)
      w_ref     : (3*H*W*Cin, H*W*Cout)   banded weights, bf16 (kh/kw/pad folded in)
      sel_ref   : (H*W*Cout, 128)         only if emit_stats: lane->channel selector
      res_ref   : (TM, H*W*Cout)          only if add_residual
      out_ref   : (TM, H*W*Cout)
      stats_ref : (1, 2, 128)             only if emit_stats: [sum, sumsq] / channel
    """
    idx = 0
    x_ref = refs[idx]; idx += 1
    scale_ref = refs[idx]; idx += 1
    bias_ref = refs[idx]; idx += 1
    w_ref = refs[idx]; idx += 1
    sel_ref = None
    if emit_stats:
        sel_ref = refs[idx]; idx += 1
    res_ref = None
    if add_residual:
        res_ref = refs[idx]; idx += 1
    out_ref = refs[idx]; idx += 1
    stats_ref = refs[idx] if emit_stats else None

    TM, hwc_in = x_ref.shape   # TM = NB * D (sample boundaries align with the block)

    # Folded BN + ReLU on the lane-dense slab.
    xn = jnp.maximum(
        x_ref[...].astype(jnp.float32) * scale_ref[...] + bias_ref[...], 0.0)

    # Depth taps via sublane rotation (XLU) + per-sample boundary masks: zero padding
    # in D is the mask, zero padding in H/W lives in the banded weights. No unaligned
    # sublane slices, no zero-row concatenates.
    drow = jax.lax.broadcasted_iota(jnp.int32, xn.shape, 0) % D   # depth index / row
    up = pltpu.roll(xn, dilation, 0)             # up[r] = xn[r - dil]
    up = jnp.where(drow >= dilation, up, 0.0)
    dn = pltpu.roll(xn, TM - dilation, 0)        # dn[r] = xn[r + dil]
    dn = jnp.where(drow < D - dilation, dn, 0.0)

    # Single MXU matmul: (TM, 3*hwc_in) x (3*hwc_in, hwc_out), bf16 in / f32 acc.
    lhs = jnp.concatenate([up, xn, dn], axis=1).astype(jnp.bfloat16)
    acc = jnp.dot(lhs, w_ref[...], preferred_element_type=jnp.float32)

    if add_residual:
        acc = acc + res_ref[...].astype(jnp.float32)

    out_ref[...] = acc.astype(out_ref.dtype)     # lane-dense store

    if emit_stats:
        # Per-channel (sum, sumsq) of this block's f32 accumulator, folded from lanes
        # to channels with the precomputed 128-lane selector -> BN2 batch statistics
        # are finished in JAX without re-reading the intermediate from HBM.
        ch_sum = jnp.sum(
            jnp.dot(acc, sel_ref[...], preferred_element_type=jnp.float32),
            axis=0, keepdims=True)                              # (1, 128)
        ch_sq = jnp.sum(
            jnp.dot(acc * acc, sel_ref[...], preferred_element_type=jnp.float32),
            axis=0, keepdims=True)                              # (1, 128)
        stats_ref[0] = jnp.concatenate([ch_sum, ch_sq], axis=0)  # (2, 128)


def fused_bn_relu_conv(xrows, scale, bias, wb_flat, *, H, W, D, cout, dilation=1,
                       residual=None, emit_stats=False, out_dtype=jnp.float32):
    """xrows: (N*D, H*W*Cin); wb_flat: (3*H*W*Cin, H*W*Cout) bf16.

    Returns (out (N*D, H*W*Cout) in out_dtype,
             stats (2, 128) f32 [per-channel sum / sumsq of out, summed over blocks]
             or None).
    """
    R, hwc_in = xrows.shape
    hwc_out = wb_flat.shape[-1]
    N = R // D
    assert R == N * D
    assert cout <= _STATS_LANES

    # Rows per grid step: whole samples only (so the depth-tap rolls never cross a
    # sample inside a block), targeting ~512 rows/step when the batch allows it.
    nb = max(1, min(N, max(1, 512 // max(D, 1))))
    while N % nb != 0:
        nb -= 1
    tm = nb * D
    grid_n = N // nb
    assert tm % 8 == 0 or grid_n == 1, "row block must be sublane aligned"

    # Pre-tile per-channel BN scale/bias over (h, w): in-kernel step is a plain
    # lane-dense multiply-add.
    scale_t = jnp.tile(scale.astype(jnp.float32), H * W).reshape(1, hwc_in)
    bias_t = jnp.tile(bias.astype(jnp.float32), H * W).reshape(1, hwc_in)

    in_specs = [
        pl.BlockSpec((tm, hwc_in), lambda g: (g, 0)),
        pl.BlockSpec((1, hwc_in), lambda g: (0, 0)),
        pl.BlockSpec((1, hwc_in), lambda g: (0, 0)),
        # Grid-invariant banded weight: constant index_map -> fetched once, resident.
        pl.BlockSpec((3 * hwc_in, hwc_out), lambda g: (0, 0)),
    ]
    args = [xrows, scale_t, bias_t, wb_flat]

    if emit_stats:
        # Lane -> channel selector, padded to 128 lanes (sliced back outside).
        r = jnp.arange(hwc_out)[:, None]
        c = jnp.arange(_STATS_LANES)[None, :]
        sel = ((r % cout) == c).astype(jnp.float32)             # (hwc_out, 128)
        in_specs.append(pl.BlockSpec((hwc_out, _STATS_LANES), lambda g: (0, 0)))
        args.append(sel)
    if residual is not None:
        in_specs.append(pl.BlockSpec((tm, hwc_out), lambda g: (g, 0)))
        args.append(residual)

    out_shapes = [jax.ShapeDtypeStruct((R, hwc_out), out_dtype)]
    out_specs = [pl.BlockSpec((tm, hwc_out), lambda g: (g, 0))]
    if emit_stats:
        out_shapes.append(
            jax.ShapeDtypeStruct((grid_n, 2, _STATS_LANES), jnp.float32))
        out_specs.append(pl.BlockSpec((1, 2, _STATS_LANES), lambda g: (g, 0, 0)))

    kernel = partial(_bn_relu_conv_kernel, D=D, dilation=dilation,
                     add_residual=residual is not None, emit_stats=emit_stats)

    outs = pl.pallas_call(
        kernel,
        out_shape=out_shapes,
        grid=(grid_n,),
        in_specs=in_specs,
        out_specs=out_specs,
        compiler_params=pltpu.CompilerParams(
            dimension_semantics=("parallel",),
            vmem_limit_bytes=32 * 1024 * 1024),
    )(*args)

    out = outs[0]
    stats = jnp.sum(outs[1], axis=0) if emit_stats else None    # (2, 128)
    return out, stats


def preactivation_block(x, params, dilation=1, eps=1e-5):
    """Forward pass of PreActivationBlock. x: (N, D, H, W, C) float32 (NDHWC)."""
    N, D, H, W, C = x.shape
    planes = params["w1"].shape[-1]
    assert params["w2"].shape[-1] == C, "residual add requires planes == inplanes"

    # One-time weight packing (layout plumbing; cache/precompute in real use).
    wb1 = _pack_banded_weight(params["w1"], H, W, dilation).astype(jnp.bfloat16)
    wb2 = _pack_banded_weight(params["w2"], H, W, dilation).astype(jnp.bfloat16)

    xrows = x.reshape(N * D, H * W * C)   # lane-dense flattened layout

    # BN1 batch statistics, single pass over x (sum & sumsq fused by XLA).
    cnt = float(N * D * H * W)
    tot1 = jnp.sum(xrows, axis=0).reshape(H * W, C).sum(axis=0)
    totsq1 = jnp.sum(xrows * xrows, axis=0).reshape(H * W, C).sum(axis=0)
    mean1 = tot1 / cnt
    var1 = jnp.maximum(totsq1 / cnt - mean1 * mean1, 0.0)
    s1 = params["gamma1"] * jax.lax.rsqrt(var1 + eps)
    b1 = params["beta1"] - mean1 * s1

    # Layer 1: BN1 -> ReLU -> conv1. Intermediate in bf16 (halves its HBM round trip),
    # per-channel (sum, sumsq) emitted so BN2 needs no extra pass over it.
    out1, stats1 = fused_bn_relu_conv(
        xrows, s1, b1, wb1, H=H, W=W, D=D, cout=planes, dilation=dilation,
        residual=None, emit_stats=True, out_dtype=jnp.bfloat16)

    # BN2 batch statistics from the fused per-block (sum, sumsq).
    # TODO(synk): for very large counts, use a shifted/Welford combine instead of
    #             E[x^2] - mean^2 to avoid cancellation.
    mean2 = stats1[0, :planes] / cnt
    var2 = jnp.maximum(stats1[1, :planes] / cnt - mean2 * mean2, 0.0)
    s2 = params["gamma2"] * jax.lax.rsqrt(var2 + eps)
    b2 = params["beta2"] - mean2 * s2

    # Layer 2: BN2 -> ReLU -> conv2 -> + residual(x), f32 output.
    out2, _ = fused_bn_relu_conv(
        out1, s2, b2, wb2, H=H, W=W, D=D, cout=planes, dilation=dilation,
        residual=xrows, emit_stats=False, out_dtype=jnp.float32)

    return out2.reshape(N, D, H, W, planes)


def _reference(x, params, dilation=1, eps=1e-5):
    """Pure-JAX f32 reference (lax conv) for validation."""
    def bn(v, gamma, beta):
        mean = jnp.mean(v, axis=(0, 1, 2, 3))
        var = jnp.mean(jnp.square(v - mean), axis=(0, 1, 2, 3))
        return (v - mean) * jax.lax.rsqrt(var + eps) * gamma + beta

    def conv(v, w):
        return jax.lax.conv_general_dilated(
            v, w, window_strides=(1, 1, 1),
            padding=[(dilation, dilation)] * 3,
            rhs_dilation=(dilation, dilation, dilation),
            dimension_numbers=("NDHWC", "DHWIO", "NDHWC"))

    out = conv(jax.nn.relu(bn(x, params["gamma1"], params["beta1"])), params["w1"])
    out = conv(jax.nn.relu(bn(out, params["gamma2"], params["beta2"])), params["w2"])
    return out + x


if __name__ == "__main__":
    # Small shapes: batch=2, inplanes=planes=4, spatial D=H=W=8, stride=1, dilation=1.
    N, C, D, H, W = 2, 4, 8, 8, 8
    planes = 4
    dilation = 1

    key = jax.random.PRNGKey(0)
    kx, kw1, kw2 = jax.random.split(key, 3)

    # NCDHW PyTorch-style input -> transpose to NDHWC kernel layout.
    x_ncdhw = jax.random.normal(kx, (N, C, D, H, W), dtype=jnp.float32)
    x = jnp.transpose(x_ncdhw, (0, 2, 3, 4, 1))  # (N, D, H, W, C)

    params = {
        # conv weights: (kD, kH, kW, Cin, Cout); deterministic synthetic init.
        "w1": 0.1 * jax.random.normal(kw1, (3, 3, 3, C, planes), dtype=jnp.float32),
        "w2": 0.1 * jax.random.normal(kw2, (3, 3, 3, planes, planes), dtype=jnp.float32),
        # BatchNorm affine params (PyTorch default init: gamma=1, beta=0).
        "gamma1": jnp.ones((C,), jnp.float32),
        "beta1": jnp.zeros((C,), jnp.float32),
        "gamma2": jnp.ones((planes,), jnp.float32),
        "beta2": jnp.zeros((planes,), jnp.float32),
    }

    out = preactivation_block(x, params, dilation=dilation)
    out = jax.block_until_ready(out)

    ref = jax.block_until_ready(_reference(x, params, dilation=dilation))
    assert out.shape == (N, D, H, W, planes), out.shape
    # bf16 MXU operands + bf16 intermediate: tolerance relaxed vs. the f32 reference.
    err = float(jnp.max(jnp.abs(out - ref)))
    assert err < 1e-1, f"max abs error {err}"

    print("KERNEL_OK")
</pallas_src>

<mosaic_0001>
module attributes {stable_mosaic.version = 11 : i64} {
  func.func @_bn_relu_conv_kernel(%arg0: i32, %arg1: memref<16x256xf32, #tpu.memory_space<vmem>>, %arg2: memref<1x256xf32, #tpu.memory_space<vmem>>, %arg3: memref<1x256xf32, #tpu.memory_space<vmem>>, %arg4: memref<768x256xbf16, #tpu.memory_space<vmem>>, %arg5: memref<256x128xf32, #tpu.memory_space<vmem>>, %arg6: memref<16x256xbf16, #tpu.memory_space<vmem>>, %arg7: memref<1x2x128xf32, #tpu.memory_space<vmem>>) attributes {dimension_semantics = [#tpu.dimension_semantics<parallel>], iteration_bounds = array<i64: 1>, scalar_prefetch = 0 : i64, scratch_operands = 0 : i64, tpu.core_type = #tpu.core_type<tc>, window_params = [{transform_indices = @transform_0, window_bounds = array<i64: 16, 256>}, {pipeline_mode = #tpu.pipeline_mode<synchronous>, transform_indices = @transform_1, window_bounds = array<i64: 1, 256>}, {pipeline_mode = #tpu.pipeline_mode<synchronous>, transform_indices = @transform_2, window_bounds = array<i64: 1, 256>}, {pipeline_mode = #tpu.pipeline_mode<synchronous>, transform_indices = @transform_3, window_bounds = array<i64: 768, 256>}, {pipeline_mode = #tpu.pipeline_mode<synchronous>, transform_indices = @transform_4, window_bounds = array<i64: 256, 128>}, {transform_indices = @transform_5, window_bounds = array<i64: 16, 256>}, {transform_indices = @transform_6, window_bounds = array<i64: 1, 2, 128>}]} {
    %c0 = arith.constant 0 : index
    %c0_0 = arith.constant 0 : index
    %0 = vector.load %arg1[%c0, %c0_0] : memref<16x256xf32, #tpu.memory_space<vmem>>, vector<16x256xf32>
    %c0_1 = arith.constant 0 : index
    %c0_2 = arith.constant 0 : index
    %1 = vector.load %arg2[%c0_1, %c0_2] : memref<1x256xf32, #tpu.memory_space<vmem>>, vector<1x256xf32>
    %2 = vector.broadcast %1 : vector<1x256xf32> to vector<16x256xf32>
    %3 = arith.mulf %0, %2 : vector<16x256xf32>
    %c0_3 = arith.constant 0 : index
    %c0_4 = arith.constant 0 : index
    %4 = vector.load %arg3[%c0_3, %c0_4] : memref<1x256xf32, #tpu.memory_space<vmem>>, vector<1x256xf32>
    %5 = vector.broadcast %4 : vector<1x256xf32> to vector<16x256xf32>
    %6 = arith.addf %3, %5 : vector<16x256xf32>
    %cst = arith.constant 0.000000e+00 : f32
    %7 = vector.broadcast %cst : f32 to vector<16x256xf32>
    %8 = arith.maximumf %6, %7 : vector<16x256xf32>
    %9 = tpu.iota {dimensions = array<i32: 0>} : vector<16x256xi32>
    %c8_i32 = arith.constant 8 : i32
    %c0_i32 = arith.constant 0 : i32
    %10 = arith.cmpi eq, %c8_i32, %c0_i32 : i32
    %c1_i32 = arith.constant 1 : i32
    %11 = arith.select %10, %c1_i32, %c8_i32 : i32
    %12 = vector.broadcast %11 : i32 to vector<16x256xi32>
    %13 = arith.remsi %9, %12 : vector<16x256xi32>
    %c0_i32_5 = arith.constant 0 : i32
    %14 = vector.broadcast %c0_i32_5 : i32 to vector<16x256xi32>
    %15 = arith.cmpi ne, %13, %14 : vector<16x256xi32>
    %c0_i32_6 = arith.constant 0 : i32
    %16 = vector.broadcast %c0_i32_6 : i32 to vector<16x256xi32>
    %17 = arith.cmpi slt, %13, %16 : vector<16x256xi32>
    %c0_i32_7 = arith.constant 0 : i32
    %18 = arith.cmpi slt, %11, %c0_i32_7 : i32
    %19 = vector.broadcast %18 : i1 to vector<16x256xi1>
    %20 = vector.broadcast %19 : vector<16x256xi1> to vector<16x256xi1>
    %21 = arith.xori %17, %20 : vector<16x256xi1>
    %22 = arith.andi %21, %15 : vector<16x256xi1>
    %23 = vector.broadcast %11 : i32 to vector<16x256xi32>
    %24 = arith.addi %13, %23 : vector<16x256xi32>
    %25 = arith.select %22, %24, %13 : vector<16x256xi1>, vector<16x256xi32>
    %c1_i32_8 = arith.constant 1 : i32
    %26 = tpu.dynamic_rotate %8 by %c1_i32_8 dim 0 : vector<16x256xf32>, i32 -> vector<16x256xf32>
    %c1_i32_9 = arith.constant 1 : i32
    %27 = vector.broadcast %c1_i32_9 : i32 to vector<16x256xi32>
    %28 = arith.cmpi sge, %25, %27 : vector<16x256xi32>
    %cst_10 = arith.constant 0.000000e+00 : f32
    %29 = vector.broadcast %cst_10 : f32 to vector<16x256xf32>
    %30 = arith.select %28, %26, %29 : vector<16x256xi1>, vector<16x256xf32>
    %c15_i32 = arith.constant 15 : i32
    %31 = tpu.dynamic_rotate %8 by %c15_i32 dim 0 : vector<16x256xf32>, i32 -> vector<16x256xf32>
    %c7_i32 = arith.constant 7 : i32
    %32 = vector.broadcast %c7_i32 : i32 to vector<16x256xi32>
    %33 = arith.cmpi slt, %25, %32 : vector<16x256xi32>
    %cst_11 = arith.constant 0.000000e+00 : f32
    %34 = vector.broadcast %cst_11 : f32 to vector<16x256xf32>
    %35 = arith.select %33, %31, %34 : vector<16x256xi1>, vector<16x256xf32>
    %36 = tpu.concatenate %30, %8, %35 in 1 : vector<16x256xf32>, vector<16x256xf32>, vector<16x256xf32> -> vector<16x768xf32>
    %37 = arith.truncf %36 : vector<16x768xf32> to vector<16x768xbf16>
    %c0_12 = arith.constant 0 : index
    %c0_13 = arith.constant 0 : index
    %38 = vector.load %arg4[%c0_12, %c0_13] : memref<768x256xbf16, #tpu.memory_space<vmem>>, vector<768x256xbf16>
    %cst_14 = arith.constant dense<0.000000e+00> : vector<16x256xf32>
    %39 = tpu.matmul %37, %38, %cst_14 {dimension_numbers = #tpu.dot_dimension_numbers<[1], [0], [0], [1], [0, 0, 1, 1], [], []>} : vector<16x768xbf16>, vector<768x256xbf16>, vector<16x256xf32> -> vector<16x256xf32>
    %40 = arith.truncf %39 : vector<16x256xf32> to vector<16x256xbf16>
    %c0_15 = arith.constant 0 : index
    %c0_16 = arith.constant 0 : index
    %41 = vector.load %arg6[%c0_15, %c0_16] : memref<16x256xbf16, #tpu.memory_space<vmem>>, vector<16x256xbf16>
    tpu.vector_store %arg6[%c0_15, %c0_16], %40 {strides = array<i32>} : memref<16x256xbf16, #tpu.memory_space<vmem>>, vector<16x256xbf16>,
    %c0_17 = arith.constant 0 : index
    %c0_18 = arith.constant 0 : index
    %42 = vector.load %arg5[%c0_17, %c0_18] : memref<256x128xf32, #tpu.memory_space<vmem>>, vector<256x128xf32>
    %cst_19 = arith.constant dense<0.000000e+00> : vector<16x128xf32>
    %43 = tpu.matmul %39, %42, %cst_19 {dimension_numbers = #tpu.dot_dimension_numbers<[1], [0], [0], [1], [0, 0, 1, 1], [], []>} : vector<16x256xf32>, vector<256x128xf32>, vector<16x128xf32> -> vector<16x128xf32>
    %cst_20 = arith.constant dense<0.000000e+00> : vector<128xf32>
    %44 = vector.multi_reduction <add>, %43, %cst_20 [0] : vector<16x128xf32> to vector<128xf32>
    %45 = vector.shape_cast %44 : vector<128xf32> to vector<1x128xf32>
    %46 = arith.mulf %39, %39 : vector<16x256xf32>
    %c0_21 = arith.constant 0 : index
    %c0_22 = arith.constant 0 : index
    %47 = vector.load %arg5[%c0_21, %c0_22] : memref<256x128xf32, #tpu.memory_space<vmem>>, vector<256x128xf32>
    %cst_23 = arith.constant dense<0.000000e+00> : vector<16x128xf32>
    %48 = tpu.matmul %46, %47, %cst_23 {dimension_numbers = #tpu.dot_dimension_numbers<[1], [0], [0], [1], [0, 0, 1, 1], [], []>} : vector<16x256xf32>, vector<256x128xf32>, vector<16x128xf32> -> vector<16x128xf32>
    %cst_24 = arith.constant dense<0.000000e+00> : vector<128xf32>
    %49 = vector.multi_reduction <add>, %48, %cst_24 [0] : vector<16x128xf32> to vector<128xf32>
    %50 = vector.shape_cast %49 : vector<128xf32> to vector<1x128xf32>
    %51 = tpu.concatenate %45, %50 in 0 : vector<1x128xf32>, vector<1x128xf32> -> vector<2x128xf32>
    %c0_25 = arith.constant 0 : index
    %c0_26 = arith.constant 0 : index
    %c0_27 = arith.constant 0 : index
    %52 = vector.load %arg7[%c0_25, %c0_26, %c0_27] : memref<1x2x128xf32, #tpu.memory_space<vmem>>, vector<1x2x128xf32>
    %53 = vector.shape_cast %52 : vector<1x2x128xf32> to vector<2x128xf32>
    %54 = vector.shape_cast %51 : vector<2x128xf32> to vector<1x2x128xf32>
    tpu.vector_store %arg7[%c0_25, %c0_26, %c0_27], %54 {strides = array<i32>} : memref<1x2x128xf32, #tpu.memory_space<vmem>>, vector<1x2x128xf32>,
    return
  }
  func.func @transform_0(%arg0: i32) -> (i32, i32) {
    %c0_i32 = arith.constant 0 : i32
    %c0_i32_0 = arith.constant 0 : i32
    return %arg0, %c0_i32 : i32, i32
  }
  func.func @transform_1(%arg0: i32) -> (i32, i32) {
    %c0_i32 = arith.constant 0 : i32
    %c0_i32_0 = arith.constant 0 : i32
    %c0_i32_1 = arith.constant 0 : i32
    return %c0_i32, %c0_i32_0 : i32, i32
  }
  func.func @transform_2(%arg0: i32) -> (i32, i32) {
    %c0_i32 = arith.constant 0 : i32
    %c0_i32_0 = arith.constant 0 : i32
    %c0_i32_1 = arith.constant 0 : i32
    return %c0_i32, %c0_i32_0 : i32, i32
  }
  func.func @transform_3(%arg0: i32) -> (i32, i32) {
    %c0_i32 = arith.constant 0 : i32
    %c0_i32_0 = arith.constant 0 : i32
    %c0_i32_1 = arith.constant 0 : i32
    return %c0_i32, %c0_i32_0 : i32, i32
  }
  func.func @transform_4(%arg0: i32) -> (i32, i32) {
    %c0_i32 = arith.constant 0 : i32
    %c0_i32_0 = arith.constant 0 : i32
    %c0_i32_1 = arith.constant 0 : i32
    return %c0_i32, %c0_i32_0 : i32, i32
  }
  func.func @transform_5(%arg0: i32) -> (i32, i32) {
    %c0_i32 = arith.constant 0 : i32
    %c0_i32_0 = arith.constant 0 : i32
    return %arg0, %c0_i32 : i32, i32
  }
  func.func @transform_6(%arg0: i32) -> (i32, i32, i32) {
    %c0_i32 = arith.constant 0 : i32
    %c0_i32_0 = arith.constant 0 : i32
    %c0_i32_1 = arith.constant 0 : i32
    return %arg0, %c0_i32, %c0_i32_0 : i32, i32, i32
  }
}

</mosaic_0001>

<llo_original>
// kernel: tpu_custom_call.1
$region0: #{tpu_custom_call.1}
  #allocation0 [shape = 'u32[]', space=smem, size = 0x4, offset = 0x4, fixed_abs, tag = 'smem constant byte address 0x4 - core index']
  #allocation1 [shape = 'u32[144,128]{1,0:T(1,128)}', space=vmem, size = 0x12000, scoped, tag = 'internal scratch']
  %s0 = inlined_call_operand.hbm [shape: f32[16,256], index: 0, kind: input, shape index: {}]
  %s1 = inlined_call_operand.vmem [shape: f32[1,256], index: 1, kind: input, shape index: {}]
  %s2 = inlined_call_operand.vmem [shape: f32[1,256], index: 2, kind: input, shape index: {}]
  %s3 = inlined_call_operand.hbm [shape: bf16[768,256], index: 3, kind: input, shape index: {}]
  %s4 = inlined_call_operand.hbm [shape: f32[256,128], index: 4, kind: input, shape index: {}]
  %s5 = inlined_call_operand.hbm [shape: bf16[16,256], index: 5, kind: output, shape index: {0}]
  %s6 = inlined_call_operand.hbm [shape: f32[1,2,128], index: 6, kind: output, shape index: {1}]
  %7 = xla_tuple %s5, %s6
  %s8 = sld [smem:[#allocation0]]
  $region50: #{tpu_custom_call.1} parent=0
    _
  %s10 = ssub.s32 1, %s8
  %s11 = scalar_select 0, %s10, %s8
  $region1: #{tpu_custom_call.1} parent=0
    #allocation2 [shape = 'u8[16384]{0}', space=vmem, size = 0x4000, scoped, tag = 'input window, operand 0, single buffered']
    #allocation3 [shape = 's32[1]{0}', space=sflag, size = 0x4, scoped, tag = 'scoped memory for tpu_custom_call.1']
    #allocation4 [shape = 's32[1]{0}', space=sflag, size = 0x4, scoped, tag = 'scoped memory for tpu_custom_call.1']
    #allocation5 [shape = 'u8[393216]{0}', space=vmem, size = 0x60000, scoped, tag = 'input window, operand 3, single buffered']
    #allocation6 [shape = 's32[1]{0}', space=sflag, size = 0x4, scoped, tag = 'scoped memory for tpu_custom_call.1']
    #allocation7 [shape = 'u8[131072]{0}', space=vmem, size = 0x20000, scoped, tag = 'input window, operand 4, single buffered']
    #allocation8 [shape = 'u8[8192]{0}', space=vmem, size = 0x2000, scoped, tag = 'output window, operand 0, single buffered']
    #allocation9 [shape = 'u8[1024]{0}', space=vmem, size = 0x400, scoped, tag = 'output window, operand 1, single buffered']
    #allocation10 [shape = 's32[1]{0}', space=sflag, size = 0x4, scoped, tag = 'scoped memory for tpu_custom_call.1']
    %12 = vsyncpa [#allocation3], 0
    %13 = vsyncpa [#allocation6], 0
    %14 = vsyncpa [#allocation4], 0
    %15 = vsyncpa [#allocation10], 0
    // Predicated region
    $region2: #{tpu_custom_call.1} parent=1 // pred_check
      _
    $region3: #{tpu_custom_call.1} parent=1 // pred_check_branch
      %17 = sbr.rel (0) target = $region5
    $region4: #{tpu_custom_call.1} parent=1 // pred_region
      %s19 = ssub.s32 512, 512
      %20 = vsyncadd [#allocation3], %s19
      %s21 = sshll.u32 [#allocation2], 4
      %s22 = int_to_ptr.vmem [resolvable:$true] %s21
      %27 = dma.hbm_to_vmem [thread:$0]  %s0, 512, %s22, [#allocation3], 256, 256, 16
    $region5: #{tpu_custom_call.1} parent=1 // pred_fallthru
      _
    // Predicated region
    $region6: #{tpu_custom_call.1} parent=1 // pred_check
      _
    $region7: #{tpu_custom_call.1} parent=1 // pred_check_branch
      %29 = sbr.rel (0) target = $region9
    $region8: #{tpu_custom_call.1} parent=1 // pred_region
      _
    $region9: #{tpu_custom_call.1} parent=1 // pred_fallthru
      _
    // Predicated region
    $region10: #{tpu_custom_call.1} parent=1 // pred_check
      _
    $region11: #{tpu_custom_call.1} parent=1 // pred_check_branch
      %31 = sbr.rel (0) target = $region13
    $region12: #{tpu_custom_call.1} parent=1 // pred_region
      _
    $region13: #{tpu_custom_call.1} parent=1 // pred_fallthru
      _
    // Predicated region
    $region14: #{tpu_custom_call.1} parent=1 // pred_check
      _
    $region15: #{tpu_custom_call.1} parent=1 // pred_check_branch
      %33 = sbr.rel (0) target = $region17
    $region16: #{tpu_custom_call.1} parent=1 // pred_region
      %s35 = ssub.s32 12288, 12288
      %36 = vsyncadd [#allocation6], %s35
      %s37 = sshll.u32 [#allocation5], 4
      %s38 = int_to_ptr.vmem [resolvable:$true] %s37
      %43 = dma.hbm_to_vmem [thread:$0]  %s3, 12288, %s38, [#allocation6], 128, 128, 8
    $region17: #{tpu_custom_call.1} parent=1 // pred_fallthru
      _
    // Predicated region
    $region18: #{tpu_custom_call.1} parent=1 // pred_check
      _
    $region19: #{tpu_custom_call.1} parent=1 // pred_check_branch
      %45 = sbr.rel (0) target = $region21
    $region20: #{tpu_custom_call.1} parent=1 // pred_region
      %s47 = ssub.s32 4096, 4096
      %48 = vsyncadd [#allocation6], %s47
      %s49 = sshll.u32 [#allocation7], 4
      %s50 = int_to_ptr.vmem [resolvable:$true] %s49
      %55 = dma.hbm_to_vmem [thread:$0]  %s4, 4096, %s50, [#allocation6], 128, 128, 8
    $region21: #{tpu_custom_call.1} parent=1 // pred_fallthru
      _
    // Predicated region
    $region22: #{tpu_custom_call.1} parent=1 // pred_check
      _
    $region23: #{tpu_custom_call.1} parent=1 // pred_check_branch
      %57 = sbr.rel (0) target = $region25
    $region24: #{tpu_custom_call.1} parent=1 // pred_region
      %58 = dma.done [#allocation3], 512
    $region25: #{tpu_custom_call.1} parent=1 // pred_fallthru
      _
    // Predicated region
    $region26: #{tpu_custom_call.1} parent=1 // pred_check
      _
    $region27: #{tpu_custom_call.1} parent=1 // pred_check_branch
      %60 = sbr.rel (0) target = $region29
    $region28: #{tpu_custom_call.1} parent=1 // pred_region
      %61 = dma.done [#allocation6], 12288
    $region29: #{tpu_custom_call.1} parent=1 // pred_fallthru
      _
    // Predicated region
    $region30: #{tpu_custom_call.1} parent=1 // pred_check
      _
    $region31: #{tpu_custom_call.1} parent=1 // pred_check_branch
      %63 = sbr.rel (0) target = $region33
    $region32: #{tpu_custom_call.1} parent=1 // pred_region
      %64 = dma.done [#allocation6], 4096
    $region33: #{tpu_custom_call.1} parent=1 // pred_fallthru
      _
    %v65 = vld [vmem:[#allocation2] sm:$0xff]
    %v66 = vld [vmem:[#allocation2 + $0x8] sm:$0xff]
    %v67 = vld [vmem:[#allocation2 + $0x10] sm:$0xff]
    %v68 = vld [vmem:[#allocation2 + $0x18] sm:$0xff]
    %v69 = vld [vmem:[%s1] sm:$0x3]
    %v71 = vlaneseq
    %v72 = vshrl.u32 %v71, 7
    %v73 = vsub.s32 0, %v72
    %v74 = vrot.slane %v69, %v73
    %v75 = vlaneseq
    %v76 = vshrl.u32 %v75, 7
    %v77 = vsub.s32 1, %v76
    %v78 = vrot.slane %v69, %v77
    %v81 = vmul.f32 %v65, %v74
    %v82 = vmul.f32 %v66, %v78
    %v83 = vmul.f32 %v67, %v74
    %v84 = vmul.f32 %v68, %v78
    %v85 = vld [vmem:[%s2] sm:$0x3]
    %v87 = vlaneseq
    %v88 = vshrl.u32 %v87, 7
    %v89 = vsub.s32 0, %v88
    %v90 = vrot.slane %v85, %v89
    %v91 = vlaneseq
    %v92 = vshrl.u32 %v91, 7
    %v93 = vsub.s32 1, %v92
    %v94 = vrot.slane %v85, %v93
    %v97 = vadd.f32 %v81, %v90
    %v98 = vadd.f32 %v82, %v94
    %v99 = vadd.f32 %v83, %v90
    %v100 = vadd.f32 %v84, %v94
    %v101 = vmax.f32 %v97, 0.0
    %v102 = vmax.f32 %v98, 0.0
    %v103 = vmax.f32 %v99, 0.0
    %v104 = vmax.f32 %v100, 0.0
    %v105 = vlaneseq
    %v106 = vshrl.u32 %v105, 7
    %v107 = vadd.s32 %v106, 8
    %vm108 = vcmp.lt.s32.totalorder %v106, 0
    %v109 = vsub.s32 0, %v106
    %v110 = vsel %vm108, %v109, %v106
    %v111 = vshrl.u32 %v110, 3
    %v112 = vand.u32 %v110, 7
    %v113 = vsub.s32 0, %v112
    %v114 = vsel %vm108, %v113, %v112
    %vm115 = vcmp.lt.s32.totalorder %v107, 0
    %v116 = vsub.s32 0, %v107
    %v117 = vsel %vm115, %v116, %v107
    %v118 = vshrl.u32 %v117, 3
    %v119 = vand.u32 %v117, 7
    %v120 = vsub.s32 0, %v119
    %v121 = vsel %vm115, %v120, %v119
    %vm122 = vcmp.ne.s32.totalorder %v114, 0
    %vm123 = vcmp.ne.s32.totalorder %v121, 0
    %vm124 = vcmp.lt.s32.totalorder %v114, 0
    %vm125 = vcmp.lt.s32.totalorder %v121, 0
    %vm126 = vmand %vm124, %vm122
    %vm127 = vmand %vm125, %vm123
    %v128 = vadd.s32 %v114, 8
    %v129 = vadd.s32 %v121, 8
    %v130 = vsel %vm126, %v128, %v114
    %v131 = vsel %vm127, %v129, %v121
    %v132 = vrot.slane %v101, 7
    %v133 = vrot.slane %v102, 7
    %v134 = vrot.slane %v103, 7
    %v135 = vrot.slane %v104, 7
    %vm136 = vcmp.lt.s32.totalorder %v106, 1
    %v137 = vsel %vm136, %v132, %v134
    %v138 = vsel %vm136, %v133, %v135
    %v139 = vsel %vm136, %v134, %v132
    %v140 = vsel %vm136, %v135, %v133
    %vm141 = vcmp.ge.s32.totalorder %v130, 1
    %vm142 = vcmp.ge.s32.totalorder %v131, 1
    %v143 = vsel %vm141, %v139, 0.0
    %v144 = vsel %vm141, %v140, 0.0
    %v145 = vsel %vm142, %v137, 0.0
    %v146 = vsel %vm142, %v138, 0.0
    %v147 = vrot.slane %v101, 1
    %v148 = vrot.slane %v102, 1
    %v149 = vrot.slane %v103, 1
    %v150 = vrot.slane %v104, 1
    %vm151 = vcmp.lt.s32.totalorder %v106, 7
    %v152 = vsel %vm151, %v147, %v149
    %v153 = vsel %vm151, %v148, %v150
    %v154 = vsel %vm151, %v149, %v147
    %v155 = vsel %vm151, %v150, %v148
    %vm156 = vcmp.lt.s32.totalorder %v130, 7
    %vm157 = vcmp.lt.s32.totalorder %v131, 7
    %v158 = vsel %vm156, %v152, 0.0
    %v159 = vsel %vm156, %v153, 0.0
    %v160 = vsel %vm157, %v154, 0.0
    %v161 = vsel %vm157, %v155, 0.0
    %v162 = vpack.c.bf16 %v145, %v143
    %v163 = vpack.c.bf16 %v146, %v144
    %v164 = vpack.c.bf16 %v103, %v101
    %v165 = vpack.c.bf16 %v104, %v102
    %v166 = vpack.c.bf16 %v160, %v158
    %v167 = vpack.c.bf16 %v161, %v159
    %v168 = vld [vmem:[#allocation5] sm:$0xff]
    %v169 = vld [vmem:[#allocation5 + $0x8] sm:$0xff]
    %v170 = vld [vmem:[#allocation5 + $0x10] sm:$0xff]
    %v171 = vld [vmem:[#allocation5 + $0x18] sm:$0xff]
    %v172 = vld [vmem:[#allocation5 + $0x20] sm:$0xff]
    %v173 = vld [vmem:[#allocation5 + $0x28] sm:$0xff]
    %v174 = vld [vmem:[#allocation5 + $0x30] sm:$0xff]
    %v175 = vld [vmem:[#allocation5 + $0x38] sm:$0xff]
    %v176 = vld [vmem:[#allocation5 + $0x40] sm:$0xff]
    %v177 = vld [vmem:[#allocation5 + $0x48] sm:$0xff]
    %v178 = vld [vmem:[#allocation5 + $0x50] sm:$0xff]
    %v179 = vld [vmem:[#allocation5 + $0x58] sm:$0xff]
    %v180 = vld [vmem:[#allocation5 + $0x60] sm:$0xff]
    %v181 = vld [vmem:[#allocation5 + $0x68] sm:$0xff]
    %v182 = vld [vmem:[#allocation5 + $0x70] sm:$0xff]
    %v183 = vld [vmem:[#allocation5 + $0x78] sm:$0xff]
    %v184 = vld [vmem:[#allocation5 + $0x80] sm:$0xff]
    %v185 = vld [vmem:[#allocation5 + $0x88] sm:$0xff]
    %v186 = vld [vmem:[#allocation5 + $0x90] sm:$0xff]
    %v187 = vld [vmem:[#allocation5 + $0x98] sm:$0xff]
    %v188 = vld [vmem:[#allocation5 + $0xa0] sm:$0xff]
    %v189 = vld [vmem:[#allocation5 + $0xa8] sm:$0xff]
    %v190 = vld [vmem:[#allocation5 + $0xb0] sm:$0xff]
    %v191 = vld [vmem:[#allocation5 + $0xb8] sm:$0xff]
    %v192 = vld [vmem:[#allocation5 + $0xc0] sm:$0xff]
    %v193 = vld [vmem:[#allocation5 + $0xc8] sm:$0xff]
    %v194 = vld [vmem:[#allocation5 + $0xd0] sm:$0xff]
    %v195 = vld [vmem:[#allocation5 + $0xd8] sm:$0xff]
    %v196 = vld [vmem:[#allocation5 + $0xe0] sm:$0xff]
    %v197 = vld [vmem:[#allocation5 + $0xe8] sm:$0xff]
    %v198 = vld [vmem:[#allocation5 + $0xf0] sm:$0xff]
    %v199 = vld [vmem:[#allocation5 + $0xf8] sm:$0xff]
    %v200 = vld [vmem:[#allocation5 + $0x100] sm:$0xff]
    %v201 = vld [vmem:[#allocation5 + $0x108] sm:$0xff]
    %v202 = vld [vmem:[#allocation5 + $0x110] sm:$0xff]
    %v203 = vld [vmem:[#allocation5 + $0x118] sm:$0xff]
    %v204 = vld [vmem:[#allocation5 + $0x120] sm:$0xff]
    %v205 = vld [vmem:[#allocation5 + $0x128] sm:$0xff]
    %v206 = vld [vmem:[#allocation5 + $0x130] sm:$0xff]
    %v207 = vld [vmem:[#allocation5 + $0x138] sm:$0xff]
    %v208 = vld [vmem:[#allocation5 + $0x140] sm:$0xff]
    %v209 = vld [vmem:[#allocation5 + $0x148] sm:$0xff]
    %v210 = vld [vmem:[#allocation5 + $0x150] sm:$0xff]
    %v211 = vld [vmem:[#allocation5 + $0x158] sm:$0xff]
    %v212 = vld [vmem:[#allocation5 + $0x160] sm:$0xff]
    %v213 = vld [vmem:[#allocation5 + $0x168] sm:$0xff]
    %v214 = vld [vmem:[#allocation5 + $0x170] sm:$0xff]
    %v215 = vld [vmem:[#allocation5 + $0x178] sm:$0xff]
    %v216 = vld [vmem:[#allocation5 + $0x180] sm:$0xff]
    %v217 = vld [vmem:[#allocation5 + $0x188] sm:$0xff]
    %v218 = vld [vmem:[#allocation5 + $0x190] sm:$0xff]
    %v219 = vld [vmem:[#allocation5 + $0x198] sm:$0xff]
    %v220 = vld [vmem:[#allocation5 + $0x1a0] sm:$0xff]
    %v221 = vld [vmem:[#allocation5 + $0x1a8] sm:$0xff]
    %v222 = vld [vmem:[#allocation5 + $0x1b0] sm:$0xff]
    %v223 = vld [vmem:[#allocation5 + $0x1b8] sm:$0xff]
    %v224 = vld [vmem:[#allocation5 + $0x1c0] sm:$0xff]
    %v225 = vld [vmem:[#allocation5 + $0x1c8] sm:$0xff]
    %v226 = vld [vmem:[#allocation5 + $0x1d0] sm:$0xff]
    %v227 = vld [vmem:[#allocation5 + $0x1d8] sm:$0xff]
    %v228 = vld [vmem:[#allocation5 + $0x1e0] sm:$0xff]
    %v229 = vld [vmem:[#allocation5 + $0x1e8] sm:$0xff]
    %v230 = vld [vmem:[#allocation5 + $0x1f0] sm:$0xff]
    %v231 = vld [vmem:[#allocation5 + $0x1f8] sm:$0xff]
    %v232 = vld [vmem:[#allocation5 + $0x200] sm:$0xff]
    %v233 = vld [vmem:[#allocation5 + $0x208] sm:$0xff]
    %v234 = vld [vmem:[#allocation5 + $0x210] sm:$0xff]
    %v235 = vld [vmem:[#allocation5 + $0x218] sm:$0xff]
    %v236 = vld [vmem:[#allocation5 + $0x220] sm:$0xff]
    %v237 = vld [vmem:[#allocation5 + $0x228] sm:$0xff]
    %v238 = vld [vmem:[#allocation5 + $0x230] sm:$0xff]
    %v239 = vld [vmem:[#allocation5 + $0x238] sm:$0xff]
    %v240 = vld [vmem:[#allocation5 + $0x240] sm:$0xff]
    %v241 = vld [vmem:[#allocation5 + $0x248] sm:$0xff]
    %v242 = vld [vmem:[#allocation5 + $0x250] sm:$0xff]
    %v243 = vld [vmem:[#allocation5 + $0x258] sm:$0xff]
    %v244 = vld [vmem:[#allocation5 + $0x260] sm:$0xff]
    %v245 = vld [vmem:[#allocation5 + $0x268] sm:$0xff]
    %v246 = vld [vmem:[#allocation5 + $0x270] sm:$0xff]
    %v247 = vld [vmem:[#allocation5 + $0x278] sm:$0xff]
    %v248 = vld [vmem:[#allocation5 + $0x280] sm:$0xff]
    %v249 = vld [vmem:[#allocation5 + $0x288] sm:$0xff]
    %v250 = vld [vmem:[#allocation5 + $0x290] sm:$0xff]
    %v251 = vld [vmem:[#allocation5 + $0x298] sm:$0xff]
    %v252 = vld [vmem:[#allocation5 + $0x2a0] sm:$0xff]
    %v253 = vld [vmem:[#allocation5 + $0x2a8] sm:$0xff]
    %v254 = vld [vmem:[#allocation5 + $0x2b0] sm:$0xff]
    %v255 = vld [vmem:[#allocation5 + $0x2b8] sm:$0xff]
    %v256 = vld [vmem:[#allocation5 + $0x2c0] sm:$0xff]
    %v257 = vld [vmem:[#allocation5 + $0x2c8] sm:$0xff]
    %v258 = vld [vmem:[#allocation5 + $0x2d0] sm:$0xff]
    %v259 = vld [vmem:[#allocation5 + $0x2d8] sm:$0xff]
    %v260 = vld [vmem:[#allocation5 + $0x2e0] sm:$0xff]
    %v261 = vld [vmem:[#allocation5 + $0x2e8] sm:$0xff]
    %v262 = vld [vmem:[#allocation5 + $0x2f0] sm:$0xff]
    %v263 = vld [vmem:[#allocation5 + $0x2f8] sm:$0xff]
    %v360 = vunpack.c.l.b16 %v168
    %v361 = vunpack.c.h.b16 %v168
    %v362 = vunpack.c.l.b16 %v169
    %v363 = vunpack.c.h.b16 %v169
    %v364 = vunpack.c.l.b16 %v170
    %v365 = vunpack.c.h.b16 %v170
    %v366 = vunpack.c.l.b16 %v171
    %v367 = vunpack.c.h.b16 %v171
    %v368 = vunpack.c.l.b16 %v172
    %v369 = vunpack.c.h.b16 %v172
    %v370 = vunpack.c.l.b16 %v173
    %v371 = vunpack.c.h.b16 %v173
    %v372 = vunpack.c.l.b16 %v174
    %v373 = vunpack.c.h.b16 %v174
    %v374 = vunpack.c.l.b16 %v175
    %v375 = vunpack.c.h.b16 %v175
    %v376 = vunpack.c.l.b16 %v176
    %v377 = vunpack.c.h.b16 %v176
    %v378 = vunpack.c.l.b16 %v177
    %v379 = vunpack.c.h.b16 %v177
    %v380 = vunpack.c.l.b16 %v178
    %v381 = vunpack.c.h.b16 %v178
    %v382 = vunpack.c.l.b16 %v179
    %v383 = vunpack.c.h.b16 %v179
    %v384 = vunpack.c.l.b16 %v180
    %v385 = vunpack.c.h.b16 %v180
    %v386 = vunpack.c.l.b16 %v181
    %v387 = vunpack.c.h.b16 %v181
    %v388 = vunpack.c.l.b16 %v182
    %v389 = vunpack.c.h.b16 %v182
    %v390 = vunpack.c.l.b16 %v183
    %v391 = vunpack.c.h.b16 %v183
    %v392 = vunpack.c.l.b16 %v184
    %v393 = vunpack.c.h.b16 %v184
    %v394 = vunpack.c.l.b16 %v185
    %v395 = vunpack.c.h.b16 %v185
    %v396 = vunpack.c.l.b16 %v186
    %v397 = vunpack.c.h.b16 %v186
    %v398 = vunpack.c.l.b16 %v187
    %v399 = vunpack.c.h.b16 %v187
    %v400 = vunpack.c.l.b16 %v188
    %v401 = vunpack.c.h.b16 %v188
    %v402 = vunpack.c.l.b16 %v189
    %v403 = vunpack.c.h.b16 %v189
    %v404 = vunpack.c.l.b16 %v190
    %v405 = vunpack.c.h.b16 %v190
    %v406 = vunpack.c.l.b16 %v191
    %v407 = vunpack.c.h.b16 %v191
    %v408 = vunpack.c.l.b16 %v192
    %v409 = vunpack.c.h.b16 %v192
    %v410 = vunpack.c.l.b16 %v193
    %v411 = vunpack.c.h.b16 %v193
    %v412 = vunpack.c.l.b16 %v194
    %v413 = vunpack.c.h.b16 %v194
    %v414 = vunpack.c.l.b16 %v195
    %v415 = vunpack.c.h.b16 %v195
    %v416 = vunpack.c.l.b16 %v196
    %v417 = vunpack.c.h.b16 %v196
    %v418 = vunpack.c.l.b16 %v197
    %v419 = vunpack.c.h.b16 %v197
    %v420 = vunpack.c.l.b16 %v198
    %v421 = vunpack.c.h.b16 %v198
    %v422 = vunpack.c.l.b16 %v199
    %v423 = vunpack.c.h.b16 %v199
    %v424 = vunpack.c.l.b16 %v200
    %v425 = vunpack.c.h.b16 %v200
    %v426 = vunpack.c.l.b16 %v201
    %v427 = vunpack.c.h.b16 %v201
    %v428 = vunpack.c.l.b16 %v202
    %v429 = vunpack.c.h.b16 %v202
    %v430 = vunpack.c.l.b16 %v203
    %v431 = vunpack.c.h.b16 %v203
    %v432 = vunpack.c.l.b16 %v204
    %v433 = vunpack.c.h.b16 %v204
    %v434 = vunpack.c.l.b16 %v205
    %v435 = vunpack.c.h.b16 %v205
    %v436 = vunpack.c.l.b16 %v206
    %v437 = vunpack.c.h.b16 %v206
    %v438 = vunpack.c.l.b16 %v207
    %v439 = vunpack.c.h.b16 %v207
    %v440 = vunpack.c.l.b16 %v208
    %v441 = vunpack.c.h.b16 %v208
    %v442 = vunpack.c.l.b16 %v209
    %v443 = vunpack.c.h.b16 %v209
    %v444 = vunpack.c.l.b16 %v210
    %v445 = vunpack.c.h.b16 %v210
    %v446 = vunpack.c.l.b16 %v211
    %v447 = vunpack.c.h.b16 %v211
    %v448 = vunpack.c.l.b16 %v212
    %v449 = vunpack.c.h.b16 %v212
    %v450 = vunpack.c.l.b16 %v213
    %v451 = vunpack.c.h.b16 %v213
    %v452 = vunpack.c.l.b16 %v214
    %v453 = vunpack.c.h.b16 %v214
    %v454 = vunpack.c.l.b16 %v215
    %v455 = vunpack.c.h.b16 %v215
    %v456 = vunpack.c.l.b16 %v216
    %v457 = vunpack.c.h.b16 %v216
    %v458 = vunpack.c.l.b16 %v217
    %v459 = vunpack.c.h.b16 %v217
    %v460 = vunpack.c.l.b16 %v218
    %v461 = vunpack.c.h.b16 %v218
    %v462 = vunpack.c.l.b16 %v219
    %v463 = vunpack.c.h.b16 %v219
    %v464 = vunpack.c.l.b16 %v220
    %v465 = vunpack.c.h.b16 %v220
    %v466 = vunpack.c.l.b16 %v221
    %v467 = vunpack.c.h.b16 %v221
    %v468 = vunpack.c.l.b16 %v222
    %v469 = vunpack.c.h.b16 %v222
    %v470 = vunpack.c.l.b16 %v223
    %v471 = vunpack.c.h.b16 %v223
    %v472 = vunpack.c.l.b16 %v224
    %v473 = vunpack.c.h.b16 %v224
    %v474 = vunpack.c.l.b16 %v225
    %v475 = vunpack.c.h.b16 %v225
    %v476 = vunpack.c.l.b16 %v226
    %v477 = vunpack.c.h.b16 %v226
    %v478 = vunpack.c.l.b16 %v227
    %v479 = vunpack.c.h.b16 %v227
    %v480 = vunpack.c.l.b16 %v228
    %v481 = vunpack.c.h.b16 %v228
    %v482 = vunpack.c.l.b16 %v229
    %v483 = vunpack.c.h.b16 %v229
    %v484 = vunpack.c.l.b16 %v230
    %v485 = vunpack.c.h.b16 %v230
    %v486 = vunpack.c.l.b16 %v231
    %v487 = vunpack.c.h.b16 %v231
    %v488 = vunpack.c.l.b16 %v232
    %v489 = vunpack.c.h.b16 %v232
    %v490 = vunpack.c.l.b16 %v233
    %v491 = vunpack.c.h.b16 %v233
    %v492 = vunpack.c.l.b16 %v234
    %v493 = vunpack.c.h.b16 %v234
    %v494 = vunpack.c.l.b16 %v235
    %v495 = vunpack.c.h.b16 %v235
    %v496 = vunpack.c.l.b16 %v236
    %v497 = vunpack.c.h.b16 %v236
    %v498 = vunpack.c.l.b16 %v237
    %v499 = vunpack.c.h.b16 %v237
    %v500 = vunpack.c.l.b16 %v238
    %v501 = vunpack.c.h.b16 %v238
    %v502 = vunpack.c.l.b16 %v239
    %v503 = vunpack.c.h.b16 %v239
    %v504 = vunpack.c.l.b16 %v240
    %v505 = vunpack.c.h.b16 %v240
    %v506 = vunpack.c.l.b16 %v241
    %v507 = vunpack.c.h.b16 %v241
    %v508 = vunpack.c.l.b16 %v242
    %v509 = vunpack.c.h.b16 %v242
    %v510 = vunpack.c.l.b16 %v243
    %v511 = vunpack.c.h.b16 %v243
    %v512 = vunpack.c.l.b16 %v244
    %v513 = vunpack.c.h.b16 %v244
    %v514 = vunpack.c.l.b16 %v245
    %v515 = vunpack.c.h.b16 %v245
    %v516 = vunpack.c.l.b16 %v246
    %v517 = vunpack.c.h.b16 %v246
    %v518 = vunpack.c.l.b16 %v247
    %v519 = vunpack.c.h.b16 %v247
    %v520 = vunpack.c.l.b16 %v248
    %v521 = vunpack.c.h.b16 %v248
    %v522 = vunpack.c.l.b16 %v249
    %v523 = vunpack.c.h.b16 %v249
    %v524 = vunpack.c.l.b16 %v250
    %v525 = vunpack.c.h.b16 %v250
    %v526 = vunpack.c.l.b16 %v251
    %v527 = vunpack.c.h.b16 %v251
    %v528 = vunpack.c.l.b16 %v252
    %v529 = vunpack.c.h.b16 %v252
    %v530 = vunpack.c.l.b16 %v253
    %v531 = vunpack.c.h.b16 %v253
    %v532 = vunpack.c.l.b16 %v254
    %v533 = vunpack.c.h.b16 %v254
    %v534 = vunpack.c.l.b16 %v255
    %v535 = vunpack.c.h.b16 %v255
    %v536 = vunpack.c.l.b16 %v256
    %v537 = vunpack.c.h.b16 %v256
    %v538 = vunpack.c.l.b16 %v257
    %v539 = vunpack.c.h.b16 %v257
    %v540 = vunpack.c.l.b16 %v258
    %v541 = vunpack.c.h.b16 %v258
    %v542 = vunpack.c.l.b16 %v259
    %v543 = vunpack.c.h.b16 %v259
    %v544 = vunpack.c.l.b16 %v260
    %v545 = vunpack.c.h.b16 %v260
    %v546 = vunpack.c.l.b16 %v261
    %v547 = vunpack.c.h.b16 %v261
    %v548 = vunpack.c.l.b16 %v262
    %v549 = vunpack.c.h.b16 %v262
    %v550 = vunpack.c.l.b16 %v263
    %v551 = vunpack.c.h.b16 %v263
    %v552 = vpack.c.b16 %v362, %v360
    %v553 = vpack.c.b16 %v363, %v361
    %v554 = vpack.c.b16 %v366, %v364
    %v555 = vpack.c.b16 %v367, %v365
    %v556 = vpack.c.b16 %v370, %v368
    %v557 = vpack.c.b16 %v371, %v369
    %v558 = vpack.c.b16 %v374, %v372
    %v559 = vpack.c.b16 %v375, %v373
    %v560 = vpack.c.b16 %v378, %v376
    %v561 = vpack.c.b16 %v379, %v377
    %v562 = vpack.c.b16 %v382, %v380
    %v563 = vpack.c.b16 %v383, %v381
    %v564 = vpack.c.b16 %v386, %v384
    %v565 = vpack.c.b16 %v387, %v385
    %v566 = vpack.c.b16 %v390, %v388
    %v567 = vpack.c.b16 %v391, %v389
    %v568 = vpack.c.b16 %v394, %v392
    %v569 = vpack.c.b16 %v395, %v393
    %v570 = vpack.c.b16 %v398, %v396
    %v571 = vpack.c.b16 %v399, %v397
    %v572 = vpack.c.b16 %v402, %v400
    %v573 = vpack.c.b16 %v403, %v401
    %v574 = vpack.c.b16 %v406, %v404
    %v575 = vpack.c.b16 %v407, %v405
    %v576 = vpack.c.b16 %v410, %v408
    %v577 = vpack.c.b16 %v411, %v409
    %v578 = vpack.c.b16 %v414, %v412
    %v579 = vpack.c.b16 %v415, %v413
    %v580 = vpack.c.b16 %v418, %v416
    %v581 = vpack.c.b16 %v419, %v417
    %v582 = vpack.c.b16 %v422, %v420
    %v583 = vpack.c.b16 %v423, %v421
    %v584 = vpack.c.b16 %v426, %v424
    %v585 = vpack.c.b16 %v427, %v425
    %v586 = vpack.c.b16 %v430, %v428
    %v587 = vpack.c.b16 %v431, %v429
    %v588 = vpack.c.b16 %v434, %v432
    %v589 = vpack.c.b16 %v435, %v433
    %v590 = vpack.c.b16 %v438, %v436
    %v591 = vpack.c.b16 %v439, %v437
    %v592 = vpack.c.b16 %v442, %v440
    %v593 = vpack.c.b16 %v443, %v441
    %v594 = vpack.c.b16 %v446, %v444
    %v595 = vpack.c.b16 %v447, %v445
    %v596 = vpack.c.b16 %v450, %v448
    %v597 = vpack.c.b16 %v451, %v449
    %v598 = vpack.c.b16 %v454, %v452
    %v599 = vpack.c.b16 %v455, %v453
    %v600 = vpack.c.b16 %v458, %v456
    %v601 = vpack.c.b16 %v459, %v457
    %v602 = vpack.c.b16 %v462, %v460
    %v603 = vpack.c.b16 %v463, %v461
    %v604 = vpack.c.b16 %v466, %v464
    %v605 = vpack.c.b16 %v467, %v465
    %v606 = vpack.c.b16 %v470, %v468
    %v607 = vpack.c.b16 %v471, %v469
    %v608 = vpack.c.b16 %v474, %v472
    %v609 = vpack.c.b16 %v475, %v473
    %v610 = vpack.c.b16 %v478, %v476
    %v611 = vpack.c.b16 %v479, %v477
    %v612 = vpack.c.b16 %v482, %v480
    %v613 = vpack.c.b16 %v483, %v481
    %v614 = vpack.c.b16 %v486, %v484
    %v615 = vpack.c.b16 %v487, %v485
    %v616 = vpack.c.b16 %v490, %v488
    %v617 = vpack.c.b16 %v491, %v489
    %v618 = vpack.c.b16 %v494, %v492
    %v619 = vpack.c.b16 %v495, %v493
    %v620 = vpack.c.b16 %v498, %v496
    %v621 = vpack.c.b16 %v499, %v497
    %v622 = vpack.c.b16 %v502, %v500
    %v623 = vpack.c.b16 %v503, %v501
    %v624 = vpack.c.b16 %v506, %v504
    %v625 = vpack.c.b16 %v507, %v505
    %v626 = vpack.c.b16 %v510, %v508
    %v627 = vpack.c.b16 %v511, %v509
    %v628 = vpack.c.b16 %v514, %v512
    %v629 = vpack.c.b16 %v515, %v513
    %v630 = vpack.c.b16 %v518, %v516
    %v631 = vpack.c.b16 %v519, %v517
    %v632 = vpack.c.b16 %v522, %v520
    %v633 = vpack.c.b16 %v523, %v521
    %v634 = vpack.c.b16 %v526, %v524
    %v635 = vpack.c.b16 %v527, %v525
    %v636 = vpack.c.b16 %v530, %v528
    %v637 = vpack.c.b16 %v531, %v529
    %v638 = vpack.c.b16 %v534, %v532
    %v639 = vpack.c.b16 %v535, %v533
    %v640 = vpack.c.b16 %v538, %v536
    %v641 = vpack.c.b16 %v539, %v537
    %v642 = vpack.c.b16 %v542, %v540
    %v643 = vpack.c.b16 %v543, %v541
    %v644 = vpack.c.b16 %v546, %v544
    %v645 = vpack.c.b16 %v547, %v545
    %v646 = vpack.c.b16 %v550, %v548
    %v647 = vpack.c.b16 %v551, %v549
    %744 = vmatprep.subr.bf16.mxu0 %v553
    %745 = vmatpush1.bf16.msra.mxu0 %v552
    %746 = vmatprep.subr.bf16.mxu0 %v555
    %747 = vmatpush1.bf16.msra.mxu0 %v554
    %748 = vmatprep.subr.bf16.mxu0 %v557
    %749 = vmatpush1.bf16.msra.mxu0 %v556
    %750 = vmatprep.subr.bf16.mxu0 %v559
    %751 = vmatpush1.bf16.msra.mxu0 %v558
    %752 = vmatprep.subr.bf16.mxu0 %v561
    %753 = vmatpush1.bf16.msra.mxu0 %v560
    %754 = vmatprep.subr.bf16.mxu0 %v563
    %755 = vmatpush1.bf16.msra.mxu0 %v562
    %756 = vmatprep.subr.bf16.mxu0 %v565
    %757 = vmatpush1.bf16.msra.mxu0 %v564
    %758 = vmatprep.subr.bf16.mxu0 %v567
    %759 = vmatpush1.bf16.msra.mxu0 %v566
    %760 = vmatprep.subr.bf16.mxu0 %v569
    %761 = vmatpush1.bf16.msra.mxu0 %v568
    %762 = vmatprep.subr.bf16.mxu0 %v571
    %763 = vmatpush1.bf16.msra.mxu0 %v570
    %764 = vmatprep.subr.bf16.mxu0 %v573
    %765 = vmatpush1.bf16.msra.mxu0 %v572
    %766 = vmatprep.subr.bf16.mxu0 %v575
    %767 = vmatpush1.bf16.msra.mxu0 %v574
    %768 = vmatprep.subr.bf16.mxu0 %v577
    %769 = vmatpush1.bf16.msra.mxu0 %v576
    %770 = vmatprep.subr.bf16.mxu0 %v579
    %771 = vmatpush1.bf16.msra.mxu0 %v578
    %772 = vmatprep.subr.bf16.mxu0 %v581
    %773 = vmatpush1.bf16.msra.mxu0 %v580
    %774 = vmatprep.subr.bf16.mxu0 %v583
    %775 = vmatpush1.bf16.msra.mxu0 %v582
    %776 = vmatprep.mubr.bf16.mxu0 %v163
    %777 = vmatmul.mubr.bf16.gmra.mrb[0].mxu0 %v162
    %v778 = vpop.f32.mrb[0].mxu0
    %v779 = vadd.f32 0.0, %v778
    %v780 = vpop.f32.mrb[0].mxu0
    %v781 = vadd.f32 0.0, %v780
    %v782 = vpop.f32.mrb[0].mxu0
    %v783 = vadd.f32 0.0, %v782
    %v784 = vpop.f32.mrb[0].mxu0
    %v785 = vadd.f32 0.0, %v784
    %786 = vdwg.mxu0
    %787 = vmatprep.subr.bf16.mxu0 %v585
    %788 = vmatpush1.bf16.msra.mxu0 %v584
    %789 = vmatprep.subr.bf16.mxu0 %v587
    %790 = vmatpush1.bf16.msra.mxu0 %v586
    %791 = vmatprep.subr.bf16.mxu0 %v589
    %792 = vmatpush1.bf16.msra.mxu0 %v588
    %793 = vmatprep.subr.bf16.mxu0 %v591
    %794 = vmatpush1.bf16.msra.mxu0 %v590
    %795 = vmatprep.subr.bf16.mxu0 %v593
    %796 = vmatpush1.bf16.msra.mxu0 %v592
    %797 = vmatprep.subr.bf16.mxu0 %v595
    %798 = vmatpush1.bf16.msra.mxu0 %v594
    %799 = vmatprep.subr.bf16.mxu0 %v597
    %800 = vmatpush1.bf16.msra.mxu0 %v596
    %801 = vmatprep.subr.bf16.mxu0 %v599
    %802 = vmatpush1.bf16.msra.mxu0 %v598
    %803 = vmatprep.subr.bf16.mxu0 %v601
    %804 = vmatpush1.bf16.msra.mxu0 %v600
    %805 = vmatprep.subr.bf16.mxu0 %v603
    %806 = vmatpush1.bf16.msra.mxu0 %v602
    %807 = vmatprep.subr.bf16.mxu0 %v605
    %808 = vmatpush1.bf16.msra.mxu0 %v604
    %809 = vmatprep.subr.bf16.mxu0 %v607
    %810 = vmatpush1.bf16.msra.mxu0 %v606
    %811 = vmatprep.subr.bf16.mxu0 %v609
    %812 = vmatpush1.bf16.msra.mxu0 %v608
    %813 = vmatprep.subr.bf16.mxu0 %v611
    %814 = vmatpush1.bf16.msra.mxu0 %v610
    %815 = vmatprep.subr.bf16.mxu0 %v613
    %816 = vmatpush1.bf16.msra.mxu0 %v612
    %817 = vmatprep.subr.bf16.mxu0 %v615
    %818 = vmatpush1.bf16.msra.mxu0 %v614
    %819 = vmatprep.mubr.bf16.mxu0 %v165
    %820 = vmatmul.mubr.bf16.gmra.mrb[0].mxu0 %v164
    %v821 = vpop.f32.mrb[0].mxu0
    %v822 = vadd.f32 %v779, %v821
    %v823 = vpop.f32.mrb[0].mxu0
    %v824 = vadd.f32 %v781, %v823
    %v825 = vpop.f32.mrb[0].mxu0
    %v826 = vadd.f32 %v783, %v825
    %v827 = vpop.f32.mrb[0].mxu0
    %v828 = vadd.f32 %v785, %v827
    %829 = vdwg.mxu0
    %830 = vmatprep.subr.bf16.mxu0 %v617
    %831 = vmatpush1.bf16.msra.mxu0 %v616
    %832 = vmatprep.subr.bf16.mxu0 %v619
    %833 = vmatpush1.bf16.msra.mxu0 %v618
    %834 = vmatprep.subr.bf16.mxu0 %v621
    %835 = vmatpush1.bf16.msra.mxu0 %v620
    %836 = vmatprep.subr.bf16.mxu0 %v623
    %837 = vmatpush1.bf16.msra.mxu0 %v622
    %838 = vmatprep.subr.bf16.mxu0 %v625
    %839 = vmatpush1.bf16.msra.mxu0 %v624
    %840 = vmatprep.subr.bf16.mxu0 %v627
    %841 = vmatpush1.bf16.msra.mxu0 %v626
    %842 = vmatprep.subr.bf16.mxu0 %v629
    %843 = vmatpush1.bf16.msra.mxu0 %v628
    %844 = vmatprep.subr.bf16.mxu0 %v631
    %845 = vmatpush1.bf16.msra.mxu0 %v630
    %846 = vmatprep.subr.bf16.mxu0 %v633
    %847 = vmatpush1.bf16.msra.mxu0 %v632
    %848 = vmatprep.subr.bf16.mxu0 %v635
    %849 = vmatpush1.bf16.msra.mxu0 %v634
    %850 = vmatprep.subr.bf16.mxu0 %v637
    %851 = vmatpush1.bf16.msra.mxu0 %v636
    %852 = vmatprep.subr.bf16.mxu0 %v639
    %853 = vmatpush1.bf16.msra.mxu0 %v638
    %854 = vmatprep.subr.bf16.mxu0 %v641
    %855 = vmatpush1.bf16.msra.mxu0 %v640
    %856 = vmatprep.subr.bf16.mxu0 %v643
    %857 = vmatpush1.bf16.msra.mxu0 %v642
    %858 = vmatprep.subr.bf16.mxu0 %v645
    %859 = vmatpush1.bf16.msra.mxu0 %v644
    %860 = vmatprep.subr.bf16.mxu0 %v647
    %861 = vmatpush1.bf16.msra.mxu0 %v646
    %862 = vmatprep.mubr.bf16.mxu0 %v167
    %863 = vmatmul.mubr.bf16.gmra.mrb[0].mxu0 %v166
    %v864 = vpop.f32.mrb[0].mxu0
    %v865 = vadd.f32 %v822, %v864
    %v866 = vpop.f32.mrb[0].mxu0
    %v867 = vadd.f32 %v824, %v866
    %v868 = vpop.f32.mrb[0].mxu0
    %v869 = vadd.f32 %v826, %v868
    %v870 = vpop.f32.mrb[0].mxu0
    %v871 = vadd.f32 %v828, %v870
    %872 = vdwg.mxu0
    %v873 = vpack.c.bf16 %v869, %v865
    %v874 = vpack.c.bf16 %v871, %v867
    %v877 = vunpack.c.l.b16 %v873
    %v878 = vunpack.c.l.b16 %v874
    %v879 = vunpack.c.h.b16 %v873
    %v880 = vunpack.c.h.b16 %v874
    %v881 = vpack.c.b16 %v878, %v877
    %v882 = vpack.c.b16 %v880, %v879
    %885 = vst [vmem:[#allocation8] sm:$0xff] %v881
    %886 = vst [vmem:[#allocation8 + $0x8] sm:$0xff] %v882
    %v887 = vld [vmem:[#allocation7] sm:$0xff]
    %v888 = vld [vmem:[#allocation7 + $0x8] sm:$0xff]
    %v889 = vld [vmem:[#allocation7 + $0x10] sm:$0xff]
    %v890 = vld [vmem:[#allocation7 + $0x18] sm:$0xff]
    %v891 = vld [vmem:[#allocation7 + $0x20] sm:$0xff]
    %v892 = vld [vmem:[#allocation7 + $0x28] sm:$0xff]
    %v893 = vld [vmem:[#allocation7 + $0x30] sm:$0xff]
    %v894 = vld [vmem:[#allocation7 + $0x38] sm:$0xff]
    %v895 = vld [vmem:[#allocation7 + $0x40] sm:$0xff]
    %v896 = vld [vmem:[#allocation7 + $0x48] sm:$0xff]
    %v897 = vld [vmem:[#allocation7 + $0x50] sm:$0xff]
    %v898 = vld [vmem:[#allocation7 + $0x58] sm:$0xff]
    %v899 = vld [vmem:[#allocation7 + $0x60] sm:$0xff]
    %v900 = vld [vmem:[#allocation7 + $0x68] sm:$0xff]
    %v901 = vld [vmem:[#allocation7 + $0x70] sm:$0xff]
    %v902 = vld [vmem:[#allocation7 + $0x78] sm:$0xff]
    %v903 = vld [vmem:[#allocation7 + $0x80] sm:$0xff]
    %v904 = vld [vmem:[#allocation7 + $0x88] sm:$0xff]
    %v905 = vld [vmem:[#allocation7 + $0x90] sm:$0xff]
    %v906 = vld [vmem:[#allocation7 + $0x98] sm:$0xff]
    %v907 = vld [vmem:[#allocation7 + $0xa0] sm:$0xff]
    %v908 = vld [vmem:[#allocation7 + $0xa8] sm:$0xff]
    %v909 = vld [vmem:[#allocation7 + $0xb0] sm:$0xff]
    %v910 = vld [vmem:[#allocation7 + $0xb8] sm:$0xff]
    %v911 = vld [vmem:[#allocation7 + $0xc0] sm:$0xff]
    %v912 = vld [vmem:[#allocation7 + $0xc8] sm:$0xff]
    %v913 = vld [vmem:[#allocation7 + $0xd0] sm:$0xff]
    %v914 = vld [vmem:[#allocation7 + $0xd8] sm:$0xff]
    %v915 = vld [vmem:[#allocation7 + $0xe0] sm:$0xff]
    %v916 = vld [vmem:[#allocation7 + $0xe8] sm:$0xff]
    %v917 = vld [vmem:[#allocation7 + $0xf0] sm:$0xff]
    %v918 = vld [vmem:[#allocation7 + $0xf8] sm:$0xff]
    %919 = vmatprep.subr.mxu0 0.0
    %920 = vmatpush1.msra.mxu0 %v887
    %921 = vmatprep.subr.mxu0 0.0
    %922 = vmatpush1.msra.mxu0 %v888
    %923 = vmatprep.subr.mxu0 0.0
    %924 = vmatpush1.msra.mxu0 %v889
    %925 = vmatprep.subr.mxu0 0.0
    %926 = vmatpush1.msra.mxu0 %v890
    %927 = vmatprep.subr.mxu0 0.0
    %928 = vmatpush1.msra.mxu0 %v891
    %929 = vmatprep.subr.mxu0 0.0
    %930 = vmatpush1.msra.mxu0 %v892
    %931 = vmatprep.subr.mxu0 0.0
    %932 = vmatpush1.msra.mxu0 %v893
    %933 = vmatprep.subr.mxu0 0.0
    %934 = vmatpush1.msra.mxu0 %v894
    %935 = vmatprep.subr.mxu0 0.0
    %936 = vmatpush1.msra.mxu0 %v895
    %937 = vmatprep.subr.mxu0 0.0
    %938 = vmatpush1.msra.mxu0 %v896
    %939 = vmatprep.subr.mxu0 0.0
    %940 = vmatpush1.msra.mxu0 %v897
    %941 = vmatprep.subr.mxu0 0.0
    %942 = vmatpush1.msra.mxu0 %v898
    %943 = vmatprep.subr.mxu0 0.0
    %944 = vmatpush1.msra.mxu0 %v899
    %945 = vmatprep.subr.mxu0 0.0
    %946 = vmatpush1.msra.mxu0 %v900
    %947 = vmatprep.subr.mxu0 0.0
    %948 = vmatpush1.msra.mxu0 %v901
    %949 = vmatprep.subr.mxu0 0.0
    %950 = vmatpush1.msra.mxu0 %v902
    %951 = vmatprep.subr.mxu0 0.0
    %952 = vmatpush1.msra.mxu0 %v903
    %953 = vmatprep.subr.mxu0 0.0
    %954 = vmatpush1.msra.mxu0 %v904
    %955 = vmatprep.subr.mxu0 0.0
    %956 = vmatpush1.msra.mxu0 %v905
    %957 = vmatprep.subr.mxu0 0.0
    %958 = vmatpush1.msra.mxu0 %v906
    %959 = vmatprep.subr.mxu0 0.0
    %960 = vmatpush1.msra.mxu0 %v907
    %961 = vmatprep.subr.mxu0 0.0
    %962 = vmatpush1.msra.mxu0 %v908
    %963 = vmatprep.subr.mxu0 0.0
    %964 = vmatpush1.msra.mxu0 %v909
    %965 = vmatprep.subr.mxu0 0.0
    %966 = vmatpush1.msra.mxu0 %v910
    %967 = vmatprep.subr.mxu0 0.0
    %968 = vmatpush1.msra.mxu0 %v911
    %969 = vmatprep.subr.mxu0 0.0
    %970 = vmatpush1.msra.mxu0 %v912
    %971 = vmatprep.subr.mxu0 0.0
    %972 = vmatpush1.msra.mxu0 %v913
    %973 = vmatprep.subr.mxu0 0.0
    %974 = vmatpush1.msra.mxu0 %v914
    %975 = vmatprep.subr.mxu0 0.0
    %976 = vmatpush1.msra.mxu0 %v915
    %977 = vmatprep.subr.mxu0 0.0
    %978 = vmatpush1.msra.mxu0 %v916
    %979 = vmatprep.subr.mxu0 0.0
    %980 = vmatpush1.msra.mxu0 %v917
    %981 = vmatprep.subr.mxu0 0.0
    %982 = vmatpush1.msra.mxu0 %v918
    %983 = vmatprep.mubr.f32.mxu0 %v867
    %984 = vmatmul.mubr.f32.gmra.mrb[0].mxu0 %v865
    %v985 = vpop.f32.mrb[0].mxu0
    %v986 = vadd.f32 0.0, %v985
    %v987 = vpop.f32.mrb[0].mxu0
    %988 = vmatprep.mubr.f32.mxu0 %v871
    %989 = vmatmul.mubr.f32.gmra.mrb[0].mxu0 %v869
    %v990 = vpop.f32.mrb[0].mxu0
    %v991 = vadd.f32 0.0, %v990
    %v992 = vpop.f32.mrb[0].mxu0
    %993 = vdwg.mxu0
    %v994 = vadd.f32 %v986, %v991
    %v995 = vrot.slane %v994, 4
    %v996 = vadd.f32 %v994, %v995
    %v997 = vrot.slane %v996, 2
    %v998 = vadd.f32 %v996, %v997
    %v999 = vrot.slane %v998, 1
    %v1000 = vadd.f32 %v998, %v999
    %v1001 = vmul.f32 %v865, %v865
    %v1002 = vmul.f32 %v867, %v867
    %v1003 = vmul.f32 %v869, %v869
    %v1004 = vmul.f32 %v871, %v871
    %1005 = vmatprep.subr.mxu0 0.0
    %1006 = vmatpush1.msra.mxu0 %v887
    %1007 = vmatprep.subr.mxu0 0.0
    %1008 = vmatpush1.msra.mxu0 %v888
    %1009 = vmatprep.subr.mxu0 0.0
    %1010 = vmatpush1.msra.mxu0 %v889
    %1011 = vmatprep.subr.mxu0 0.0
    %1012 = vmatpush1.msra.mxu0 %v890
    %1013 = vmatprep.subr.mxu0 0.0
    %1014 = vmatpush1.msra.mxu0 %v891
    %1015 = vmatprep.subr.mxu0 0.0
    %1016 = vmatpush1.msra.mxu0 %v892
    %1017 = vmatprep.subr.mxu0 0.0
    %1018 = vmatpush1.msra.mxu0 %v893
    %1019 = vmatprep.subr.mxu0 0.0
    %1020 = vmatpush1.msra.mxu0 %v894
    %1021 = vmatprep.subr.mxu0 0.0
    %1022 = vmatpush1.msra.mxu0 %v895
    %1023 = vmatprep.subr.mxu0 0.0
    %1024 = vmatpush1.msra.mxu0 %v896
    %1025 = vmatprep.subr.mxu0 0.0
    %1026 = vmatpush1.msra.mxu0 %v897
    %1027 = vmatprep.subr.mxu0 0.0
    %1028 = vmatpush1.msra.mxu0 %v898
    %1029 = vmatprep.subr.mxu0 0.0
    %1030 = vmatpush1.msra.mxu0 %v899
    %1031 = vmatprep.subr.mxu0 0.0
    %1032 = vmatpush1.msra.mxu0 %v900
    %1033 = vmatprep.subr.mxu0 0.0
    %1034 = vmatpush1.msra.mxu0 %v901
    %1035 = vmatprep.subr.mxu0 0.0
    %1036 = vmatpush1.msra.mxu0 %v902
    %1037 = vmatprep.subr.mxu0 0.0
    %1038 = vmatpush1.msra.mxu0 %v903
    %1039 = vmatprep.subr.mxu0 0.0
    %1040 = vmatpush1.msra.mxu0 %v904
    %1041 = vmatprep.subr.mxu0 0.0
    %1042 = vmatpush1.msra.mxu0 %v905
    %1043 = vmatprep.subr.mxu0 0.0
    %1044 = vmatpush1.msra.mxu0 %v906
    %1045 = vmatprep.subr.mxu0 0.0
    %1046 = vmatpush1.msra.mxu0 %v907
    %1047 = vmatprep.subr.mxu0 0.0
    %1048 = vmatpush1.msra.mxu0 %v908
    %1049 = vmatprep.subr.mxu0 0.0
    %1050 = vmatpush1.msra.mxu0 %v909
    %1051 = vmatprep.subr.mxu0 0.0
    %1052 = vmatpush1.msra.mxu0 %v910
    %1053 = vmatprep.subr.mxu0 0.0
    %1054 = vmatpush1.msra.mxu0 %v911
    %1055 = vmatprep.subr.mxu0 0.0
    %1056 = vmatpush1.msra.mxu0 %v912
    %1057 = vmatprep.subr.mxu0 0.0
    %1058 = vmatpush1.msra.mxu0 %v913
    %1059 = vmatprep.subr.mxu0 0.0
    %1060 = vmatpush1.msra.mxu0 %v914
    %1061 = vmatprep.subr.mxu0 0.0
    %1062 = vmatpush1.msra.mxu0 %v915
    %1063 = vmatprep.subr.mxu0 0.0
    %1064 = vmatpush1.msra.mxu0 %v916
    %1065 = vmatprep.subr.mxu0 0.0
    %1066 = vmatpush1.msra.mxu0 %v917
    %1067 = vmatprep.subr.mxu0 0.0
    %1068 = vmatpush1.msra.mxu0 %v918
    %1069 = vmatprep.mubr.f32.mxu0 %v1002
    %1070 = vmatmul.mubr.f32.gmra.mrb[0].mxu0 %v1001
    %v1071 = vpop.f32.mrb[0].mxu0
    %v1072 = vadd.f32 0.0, %v1071
    %v1073 = vpop.f32.mrb[0].mxu0
    %1074 = vmatprep.mubr.f32.mxu0 %v1004
    %1075 = vmatmul.mubr.f32.gmra.mrb[0].mxu0 %v1003
    %v1076 = vpop.f32.mrb[0].mxu0
    %v1077 = vadd.f32 0.0, %v1076
    %v1078 = vpop.f32.mrb[0].mxu0
    %1079 = vdwg.mxu0
    %v1080 = vadd.f32 %v1072, %v1077
    %v1081 = vrot.slane %v1080, 4
    %v1082 = vadd.f32 %v1080, %v1081
    %v1083 = vrot.slane %v1082, 2
    %v1084 = vadd.f32 %v1082, %v1083
    %v1085 = vrot.slane %v1084, 1
    %v1086 = vadd.f32 %v1084, %v1085
    %vm1087 = vcmask 1040384
    %v1088 = vsel %vm1087, %v1000, %v1086
    %1089 = vst [vmem:[#allocation9] sm:$0x3] %v1088
    // Predicated region
    $region34: #{tpu_custom_call.1} parent=1 // pred_check
      _
    $region35: #{tpu_custom_call.1} parent=1 // pred_check_branch
      %1091 = sbr.rel (0) target = $region37
    $region36: #{tpu_custom_call.1} parent=1 // pred_region
      %s1093 = ssub.s32 256, 256
      %1094 = vsyncadd [#allocation4], %s1093
      %s1095 = sshll.u32 [#allocation8], 4
      %s1096 = int_to_ptr.vmem [resolvable:$true] %s1095
      %1101 = dma.vmem_to_hbm [thread:$0]  %s1096, 256, %s5, [#allocation4], 128, 128, 8
    $region37: #{tpu_custom_call.1} parent=1 // pred_fallthru
      _
    // Predicated region
    $region38: #{tpu_custom_call.1} parent=1 // pred_check
      _
    $region39: #{tpu_custom_call.1} parent=1 // pred_check_branch
      %1103 = sbr.rel (0) target = $region41
    $region40: #{tpu_custom_call.1} parent=1 // pred_region
      %s1105 = ssub.s32 32, 32
      %1106 = vsyncadd [#allocation10], %s1105
      %s1108 = sshll.u32 [#allocation9], 4
      %s1109 = int_to_ptr.vmem [resolvable:$true] %s1108
      %1111 = dma.vmem_to_hbm [thread:$0]  %s1109, 32, %s6, [#allocation10]
    $region41: #{tpu_custom_call.1} parent=1 // pred_fallthru
      _
    // Predicated region
    $region42: #{tpu_custom_call.1} parent=1 // pred_check
      _
    $region43: #{tpu_custom_call.1} parent=1 // pred_check_branch
      %1113 = sbr.rel (0) target = $region45
    $region44: #{tpu_custom_call.1} parent=1 // pred_region
      %1114 = dma.done [#allocation4], 256
    $region45: #{tpu_custom_call.1} parent=1 // pred_fallthru
      _
    // Predicated region
    $region46: #{tpu_custom_call.1} parent=1 // pred_check
      _
    $region47: #{tpu_custom_call.1} parent=1 // pred_check_branch
      %1116 = sbr.rel (0) target = $region49
    $region48: #{tpu_custom_call.1} parent=1 // pred_region
      %1117 = dma.done [#allocation10], 32
    $region49: #{tpu_custom_call.1} parent=1 // pred_fallthru
      _
    %1118 = vsyncpa [#allocation3], 1
    %1119 = vsyncpa [#allocation6], 1
    %1120 = vsyncpa [#allocation4], 1
    %1121 = vsyncpa [#allocation10], 1

</llo_original>
